<compile_context>
chip_gen: v7x
topology: tpu7x:2x2x1
jax: 0.10.0
libtpu: 0.0.40
codegen_flags: <defaults>
</compile_context>

<pallas_src>
import jax
import jax.numpy as jnp
from jax.experimental import pallas as pl
from jax.experimental.pallas import tpu as pltpu


def _hbm_copy_kernel(x_hbm_ref, o_hbm_ref, sem):
    # Single whole-buffer HBM -> HBM DMA; no VMEM staging, no vector ops.
    cp = pltpu.make_async_copy(x_hbm_ref, o_hbm_ref, sem)
    cp.start()
    cp.wait()


def expand_resnet_forward(inputs, out_size=1024, use_pallas=True):
    """JAX equivalent of Expand_ResNet.forward.

    `inputs` is a tuple/list whose first element has shape [B, out_size*7*7]
    (any contiguous shape with B*out_size*49 elements works).
    Returns an array of shape [B, out_size, 7, 7].

    use_pallas=False is the recommended production path: the reshape is
    metadata-only and costs nothing.  use_pallas=True routes through a
    minimal Pallas kernel (one HBM->HBM DMA) to satisfy the kernel
    requirement with the least possible overhead.
    """
    x = inputs[0]
    B = x.shape[0]
    flat = out_size * 7 * 7
    assert x.size == B * flat, f"expected {B * flat} elements, got {x.size}"

    if not use_pallas:
        # Zero-cost path: metadata-only reshape (same semantics as
        # torch.reshape on a contiguous tensor).
        return x.reshape(B, out_size, 7, 7)

    # Flat 2D view (metadata-only).  For the default out_size the lane dim
    # (out_size*49) is a multiple of 128; the HBM->HBM DMA does not require
    # it, this is just a clean contiguous slab.
    x2 = x.reshape(B, flat)
    itemsize = jnp.dtype(x.dtype).itemsize
    total_bytes = B * flat * itemsize

    flat_out = pl.pallas_call(
        _hbm_copy_kernel,
        out_shape=jax.ShapeDtypeStruct((B, flat), x.dtype),
        # Keep both operands in HBM: no auto-DMA, no VMEM footprint at all.
        in_specs=[pl.BlockSpec(memory_space=pl.ANY)],
        out_specs=pl.BlockSpec(memory_space=pl.ANY),
        scratch_shapes=[pltpu.SemaphoreType.DMA(())],
        # Pure bandwidth op: read total_bytes + write total_bytes, no flops.
        cost_estimate=pl.CostEstimate(
            flops=0, transcendentals=0, bytes_accessed=2 * total_bytes),
    )(x2)

    # Metadata-only reshape to NCHW [B, out_size, 7, 7].
    return flat_out.reshape(B, out_size, 7, 7)


if __name__ == "__main__":
    # Small shapes consistent with the module: batch=2, out_size=128 -> the
    # flat feature tensor is [2, 128*7*7] = [2, 6272].
    out_size = 128
    B = 2
    key = jax.random.PRNGKey(0)
    x = jax.random.normal(key, (B, out_size * 7 * 7), dtype=jnp.float32)

    ref = x.reshape(B, out_size, 7, 7)

    # Pallas kernel path (single HBM->HBM DMA).
    y = expand_resnet_forward((x,), out_size=out_size, use_pallas=True)
    y = jax.block_until_ready(y)
    assert y.shape == (B, out_size, 7, 7)
    assert y.dtype == x.dtype
    assert bool(jnp.array_equal(y, ref))

    # Zero-cost metadata-only path (recommended in production).
    y0 = expand_resnet_forward((x,), out_size=out_size, use_pallas=False)
    y0 = jax.block_until_ready(y0)
    assert bool(jnp.array_equal(y0, ref))

    print("KERNEL_OK")
</pallas_src>

<mosaic_0001>
module attributes {stable_mosaic.version = 11 : i64} {
  func.func @_hbm_copy_kernel(%arg0: memref<2x6272xf32, #tpu.memory_space<any>>, %arg1: memref<2x6272xf32, #tpu.memory_space<any>>, %arg2: memref<!tpu.dma_semaphore, #tpu.memory_space<semaphore_mem>>) attributes {dimension_semantics = [], scalar_prefetch = 0 : i64, scratch_operands = 1 : i64, tpu.core_type = #tpu.core_type<tc>} {
    tpu.enqueue_dma source(%arg0 : memref<2x6272xf32, #tpu.memory_space<any>>) target(%arg1 : memref<2x6272xf32, #tpu.memory_space<any>>) target_semaphore(%arg2 : memref<!tpu.dma_semaphore, #tpu.memory_space<semaphore_mem>>)
    tpu.wait_dma2 semaphore(%arg2 : memref<!tpu.dma_semaphore, #tpu.memory_space<semaphore_mem>>) src(%arg0 : memref<2x6272xf32, #tpu.memory_space<any>>) dst(%arg1 : memref<2x6272xf32, #tpu.memory_space<any>>)
    return
  }
}

</mosaic_0001>

<llo_original>
// kernel: tpu_custom_call.1
$region0: #{tpu_custom_call.1}
  #allocation0 [shape = 'u32[]', space=smem, size = 0x4, offset = 0x4, fixed_abs, tag = 'smem constant byte address 0x4 - core index']
  #allocation1 [shape = 'u32[144,128]{1,0:T(1,128)}', space=vmem, size = 0x12000, scoped, tag = 'internal scratch']
  #allocation2 [shape = 's32[1]{0}', space=sflag, size = 0x4, scoped, tag = 'scratch operand']
  #allocation3 [shape = 's32[]', space=sflag, size = 0x4, offset = 0, fixed_abs, tag = 'sflag constant byte address 0x0 - dummy sync flag']
  #allocation4 [shape = 'u32[0]{0}', space=smem, size = 0, offset = 0, fixed_abs, tag = 'smem constant byte address 0x0 - null']
  %s0 = inlined_call_operand.hbm [shape: f32[2,6272], index: 0, kind: input, shape index: {}]
  %s1 = inlined_call_operand.hbm [shape: f32[2,6272], index: 1, kind: output, shape index: {}]
  %s2 = sld [smem:[#allocation0]]
  $region2: #{tpu_custom_call.1} parent=0
    _
  %s4 = ssub.s32 1, %s2
  %s5 = scalar_select 0, %s4, %s2
  %s7 = sshll.u32 1, 14
  %s8 = sxor.u32 4294967295, %s7
  %s11 = sshll.u32 3, 24
  %s12 = sxor.u32 4294967295, %s11
  %s13 = sand.u32 0, %s12
  %s15 = sor.u32 %s13, 0
  %18 = dma.general %s0, 1568, %s1, [#allocation2], [#allocation3], [#allocation4], %s15, 0
  %s19 = smul.u32 2, 1
  %s20 = smul.u32 %s19, 49
  %s21 = sshll.u32 %s20, 4
  %22 = dma.done [#allocation2], %s21
  %23 = vsyncmov [#allocation2]
  %s24 = vpop.sfrf %23
  %p25 = scmp.eq.s32.totalorder %s24, 0
  %p26 = pneg %p25
  %28 = shalt.err (%p26)

</llo_original>
